<compile_context>
chip_gen: v5e
topology: v5e:2x2
jax: 0.10.0
libtpu: 0.0.40
codegen_flags: <defaults>
</compile_context>

<pallas_src>
import jax
import jax.numpy as jnp
from jax.experimental import pallas as pl
from jax.experimental.pallas import tpu as pltpu

ACT_PAD = 128  # pad action dimension to a full lane width for dense stores


def _round_up(x, m):
    return (x + m - 1) // m * m


def _actor_kernel(x_ref, w1_ref, b1_ref, w2_ref, b2_ref,
                  wmu_ref, bmu_ref, scale_ref, bias_ref, o_ref):
    # fc1 on the pre-concatenated [x || trajectory] input: one K=in_dim MXU pass.
    x = x_ref[...].astype(jnp.bfloat16)
    h1 = jnp.dot(x, w1_ref[...], preferred_element_type=jnp.float32) + b1_ref[...]
    h1 = jnp.maximum(h1, 0.0)

    # fc2
    h2 = (jnp.dot(h1.astype(jnp.bfloat16), w2_ref[...],
                  preferred_element_type=jnp.float32) + b2_ref[...])
    h2 = jnp.maximum(h2, 0.0)

    # fc_mu + tanh + action rescale (lane-padded to 128)
    mu = jnp.tanh(jnp.dot(h2.astype(jnp.bfloat16), wmu_ref[...],
                          preferred_element_type=jnp.float32) + bmu_ref[...])
    o_ref[...] = mu * scale_ref[...] + bias_ref[...]


def actor_forward(x, trajectory, params, *, block_b=128):
    """x: [B, obs_dim], trajectory: [B, obs_dim*(T-1)] -> actions [B, act_dim]."""
    B = x.shape[0]
    act_dim = params["act_dim"]

    # Fold torch.cat([x, trajectory], -1) into a single fc1 operand.
    xin = jnp.concatenate([x, trajectory], axis=-1).astype(jnp.float32)
    in_dim = xin.shape[-1]
    H = params["w2"].shape[0]

    # Batch tile: at least one full sublane group (8), at most block_b rows.
    TB = min(block_b, _round_up(B, 8))
    B_pad = _round_up(B, TB)
    if B_pad != B:
        xin = jnp.pad(xin, ((0, B_pad - B), (0, 0)))

    grid = (B_pad // TB,)

    def batch_map(i):
        return (i, 0)

    def const_map(i):          # weights stay VMEM-resident across grid steps
        return (0, 0)

    in_specs = [
        pl.BlockSpec((TB, in_dim), batch_map),      # xin
        pl.BlockSpec((in_dim, H), const_map),       # w1 (bf16)
        pl.BlockSpec((1, H), const_map),            # b1
        pl.BlockSpec((H, H), const_map),            # w2 (bf16)
        pl.BlockSpec((1, H), const_map),            # b2
        pl.BlockSpec((H, ACT_PAD), const_map),      # wmu (bf16, lane-padded)
        pl.BlockSpec((1, ACT_PAD), const_map),      # bmu
        pl.BlockSpec((1, ACT_PAD), const_map),      # scale
        pl.BlockSpec((1, ACT_PAD), const_map),      # bias
    ]
    out_spec = pl.BlockSpec((TB, ACT_PAD), batch_map)

    out = pl.pallas_call(
        _actor_kernel,
        out_shape=jax.ShapeDtypeStruct((B_pad, ACT_PAD), jnp.float32),
        grid=grid,
        in_specs=in_specs,
        out_specs=out_spec,
        compiler_params=pltpu.CompilerParams(
            dimension_semantics=("parallel",)),   # 2nd TC on v7x; no-op on v5e/v6e
    )(xin, params["w1"], params["b1"], params["w2"], params["b2"],
      params["wmu"], params["bmu"], params["scale"], params["bias"])

    return out[:B, :act_dim]


def init_actor_params(key, obs_dim, trajectory_length, actor_model_size, act_dim,
                      action_low, action_high):
    """PyTorch-style (uniform +-1/sqrt(fan_in)) init; returns (kernel params, f32 ref params)."""
    in_dim = obs_dim * trajectory_length          # = obs_dim + obs_dim*(T-1)
    k1, k2, k3, k4, k5, k6 = jax.random.split(key, 6)

    def lin(kw, kb, fan_in, fan_out):
        bound = 1.0 / jnp.sqrt(jnp.float32(fan_in))
        w = jax.random.uniform(kw, (fan_in, fan_out), jnp.float32, -bound, bound)
        b = jax.random.uniform(kb, (1, fan_out), jnp.float32, -bound, bound)
        return w, b

    w1, b1 = lin(k1, k2, in_dim, actor_model_size)
    w2, b2 = lin(k3, k4, actor_model_size, actor_model_size)
    wmu, bmu = lin(k5, k6, actor_model_size, act_dim)
    scale = ((action_high - action_low) / 2.0).reshape(1, act_dim).astype(jnp.float32)
    bias = ((action_high + action_low) / 2.0).reshape(1, act_dim).astype(jnp.float32)

    pad_a = ACT_PAD - act_dim
    params = {
        "act_dim": act_dim,
        "w1": w1.astype(jnp.bfloat16),
        "b1": b1,
        "w2": w2.astype(jnp.bfloat16),
        "b2": b2,
        "wmu": jnp.pad(wmu, ((0, 0), (0, pad_a))).astype(jnp.bfloat16),
        "bmu": jnp.pad(bmu, ((0, 0), (0, pad_a))),
        "scale": jnp.pad(scale, ((0, 0), (0, pad_a))),
        "bias": jnp.pad(bias, ((0, 0), (0, pad_a))),
    }
    ref = {"w1": w1, "b1": b1, "w2": w2, "b2": b2,
           "wmu": wmu, "bmu": bmu, "scale": scale, "bias": bias}
    return params, ref


def actor_reference_bf16(x, trajectory, params):
    """Plain-JAX reference mirroring the kernel numerics (bf16 operands, f32 accum)."""
    act_dim = params["act_dim"]
    xin = jnp.concatenate([x, trajectory], axis=-1).astype(jnp.bfloat16)
    h1 = jnp.maximum(jnp.dot(xin, params["w1"],
                             preferred_element_type=jnp.float32) + params["b1"], 0.0)
    h2 = jnp.maximum(jnp.dot(h1.astype(jnp.bfloat16), params["w2"],
                             preferred_element_type=jnp.float32) + params["b2"], 0.0)
    mu = jnp.tanh(jnp.dot(h2.astype(jnp.bfloat16), params["wmu"],
                          preferred_element_type=jnp.float32) + params["bmu"])
    out = mu * params["scale"] + params["bias"]
    return out[:, :act_dim]


def actor_reference_f32(x, trajectory, ref):
    """Full-f32 reference mirroring the original PyTorch forward (semantic check)."""
    xin = jnp.concatenate([x, trajectory], axis=-1)
    h1 = jax.nn.relu(xin @ ref["w1"] + ref["b1"])
    h2 = jax.nn.relu(h1 @ ref["w2"] + ref["b2"])
    mu = jnp.tanh(h2 @ ref["wmu"] + ref["bmu"])
    return mu * ref["scale"] + ref["bias"]


if __name__ == "__main__":
    # Small shapes consistent with the module: trajectory_length=8,
    # actor_model_size=256 (from Args), obs_dim=10, action_dim=2, batch=2.
    B = 2
    OBS_DIM = 10
    TRAJECTORY_LENGTH = 8
    ACTOR_MODEL_SIZE = 256
    ACT_DIM = 2

    key = jax.random.PRNGKey(0)
    kx, kt, kp = jax.random.split(key, 3)

    x = jax.random.normal(kx, (B, OBS_DIM), jnp.float32)
    trajectory = jax.random.normal(kt, (B, OBS_DIM * (TRAJECTORY_LENGTH - 1)), jnp.float32)

    # action space: low = [-1, 0], high = [1, 2]  ->  nontrivial scale/bias
    action_low = jnp.array([-1.0, 0.0], jnp.float32)
    action_high = jnp.array([1.0, 2.0], jnp.float32)

    params, ref_params = init_actor_params(kp, OBS_DIM, TRAJECTORY_LENGTH,
                                           ACTOR_MODEL_SIZE, ACT_DIM,
                                           action_low, action_high)

    out = actor_forward(x, trajectory, params)
    out = jax.block_until_ready(out)
    assert out.shape == (B, ACT_DIM)

    # Tight check vs. a reference that uses the same bf16-weight numerics.
    ref_bf16 = actor_reference_bf16(x, trajectory, params)
    assert jnp.allclose(out, ref_bf16, atol=1e-3, rtol=1e-3), (out, ref_bf16)

    # Loose check vs. the original f32 PyTorch-equivalent forward (semantics).
    ref_f32 = actor_reference_f32(x, trajectory, ref_params)
    assert jnp.allclose(out, ref_f32, atol=1e-1), (out, ref_f32)

    print("KERNEL_OK")
</pallas_src>

<mosaic_0001>
module attributes {stable_mosaic.version = 11 : i64} {
  func.func @_actor_kernel(%arg0: i32, %arg1: memref<8x80xf32, #tpu.memory_space<vmem>>, %arg2: memref<80x256xbf16, #tpu.memory_space<vmem>>, %arg3: memref<1x256xf32, #tpu.memory_space<vmem>>, %arg4: memref<256x256xbf16, #tpu.memory_space<vmem>>, %arg5: memref<1x256xf32, #tpu.memory_space<vmem>>, %arg6: memref<256x128xbf16, #tpu.memory_space<vmem>>, %arg7: memref<1x128xf32, #tpu.memory_space<vmem>>, %arg8: memref<1x128xf32, #tpu.memory_space<vmem>>, %arg9: memref<1x128xf32, #tpu.memory_space<vmem>>, %arg10: memref<8x128xf32, #tpu.memory_space<vmem>>) attributes {dimension_semantics = [#tpu.dimension_semantics<parallel>], iteration_bounds = array<i64: 1>, scalar_prefetch = 0 : i64, scratch_operands = 0 : i64, tpu.core_type = #tpu.core_type<tc>, window_params = [{transform_indices = @transform_0, window_bounds = array<i64: 8, 80>}, {pipeline_mode = #tpu.pipeline_mode<synchronous>, transform_indices = @transform_1, window_bounds = array<i64: 80, 256>}, {pipeline_mode = #tpu.pipeline_mode<synchronous>, transform_indices = @transform_2, window_bounds = array<i64: 1, 256>}, {pipeline_mode = #tpu.pipeline_mode<synchronous>, transform_indices = @transform_3, window_bounds = array<i64: 256, 256>}, {pipeline_mode = #tpu.pipeline_mode<synchronous>, transform_indices = @transform_4, window_bounds = array<i64: 1, 256>}, {pipeline_mode = #tpu.pipeline_mode<synchronous>, transform_indices = @transform_5, window_bounds = array<i64: 256, 128>}, {pipeline_mode = #tpu.pipeline_mode<synchronous>, transform_indices = @transform_6, window_bounds = array<i64: 1, 128>}, {pipeline_mode = #tpu.pipeline_mode<synchronous>, transform_indices = @transform_7, window_bounds = array<i64: 1, 128>}, {pipeline_mode = #tpu.pipeline_mode<synchronous>, transform_indices = @transform_8, window_bounds = array<i64: 1, 128>}, {transform_indices = @transform_9, window_bounds = array<i64: 8, 128>}]} {
    %c0 = arith.constant 0 : index
    %c0_0 = arith.constant 0 : index
    %0 = vector.load %arg1[%c0, %c0_0] : memref<8x80xf32, #tpu.memory_space<vmem>>, vector<8x80xf32>
    %1 = arith.truncf %0 : vector<8x80xf32> to vector<8x80xbf16>
    %c0_1 = arith.constant 0 : index
    %c0_2 = arith.constant 0 : index
    %2 = vector.load %arg2[%c0_1, %c0_2] : memref<80x256xbf16, #tpu.memory_space<vmem>>, vector<80x256xbf16>
    %cst = arith.constant dense<0.000000e+00> : vector<8x256xf32>
    %3 = tpu.matmul %1, %2, %cst {dimension_numbers = #tpu.dot_dimension_numbers<[1], [0], [0], [1], [0, 0, 1, 1], [], []>} : vector<8x80xbf16>, vector<80x256xbf16>, vector<8x256xf32> -> vector<8x256xf32>
    %c0_3 = arith.constant 0 : index
    %c0_4 = arith.constant 0 : index
    %4 = vector.load %arg3[%c0_3, %c0_4] : memref<1x256xf32, #tpu.memory_space<vmem>>, vector<1x256xf32>
    %5 = vector.broadcast %4 : vector<1x256xf32> to vector<8x256xf32>
    %6 = arith.addf %3, %5 : vector<8x256xf32>
    %cst_5 = arith.constant 0.000000e+00 : f32
    %7 = vector.broadcast %cst_5 : f32 to vector<8x256xf32>
    %8 = arith.maximumf %6, %7 : vector<8x256xf32>
    %9 = arith.truncf %8 : vector<8x256xf32> to vector<8x256xbf16>
    %c0_6 = arith.constant 0 : index
    %c0_7 = arith.constant 0 : index
    %10 = vector.load %arg4[%c0_6, %c0_7] : memref<256x256xbf16, #tpu.memory_space<vmem>>, vector<256x256xbf16>
    %cst_8 = arith.constant dense<0.000000e+00> : vector<8x256xf32>
    %11 = tpu.matmul %9, %10, %cst_8 {dimension_numbers = #tpu.dot_dimension_numbers<[1], [0], [0], [1], [0, 0, 1, 1], [], []>} : vector<8x256xbf16>, vector<256x256xbf16>, vector<8x256xf32> -> vector<8x256xf32>
    %c0_9 = arith.constant 0 : index
    %c0_10 = arith.constant 0 : index
    %12 = vector.load %arg5[%c0_9, %c0_10] : memref<1x256xf32, #tpu.memory_space<vmem>>, vector<1x256xf32>
    %13 = vector.broadcast %12 : vector<1x256xf32> to vector<8x256xf32>
    %14 = arith.addf %11, %13 : vector<8x256xf32>
    %cst_11 = arith.constant 0.000000e+00 : f32
    %15 = vector.broadcast %cst_11 : f32 to vector<8x256xf32>
    %16 = arith.maximumf %14, %15 : vector<8x256xf32>
    %17 = arith.truncf %16 : vector<8x256xf32> to vector<8x256xbf16>
    %c0_12 = arith.constant 0 : index
    %c0_13 = arith.constant 0 : index
    %18 = vector.load %arg6[%c0_12, %c0_13] : memref<256x128xbf16, #tpu.memory_space<vmem>>, vector<256x128xbf16>
    %cst_14 = arith.constant dense<0.000000e+00> : vector<8x128xf32>
    %19 = tpu.matmul %17, %18, %cst_14 {dimension_numbers = #tpu.dot_dimension_numbers<[1], [0], [0], [1], [0, 0, 1, 1], [], []>} : vector<8x256xbf16>, vector<256x128xbf16>, vector<8x128xf32> -> vector<8x128xf32>
    %c0_15 = arith.constant 0 : index
    %c0_16 = arith.constant 0 : index
    %20 = vector.load %arg7[%c0_15, %c0_16] : memref<1x128xf32, #tpu.memory_space<vmem>>, vector<1x128xf32>
    %21 = vector.broadcast %20 : vector<1x128xf32> to vector<8x128xf32>
    %22 = arith.addf %19, %21 : vector<8x128xf32>
    %23 = math.tanh %22 : vector<8x128xf32>
    %c0_17 = arith.constant 0 : index
    %c0_18 = arith.constant 0 : index
    %24 = vector.load %arg8[%c0_17, %c0_18] : memref<1x128xf32, #tpu.memory_space<vmem>>, vector<1x128xf32>
    %25 = vector.broadcast %24 : vector<1x128xf32> to vector<8x128xf32>
    %26 = arith.mulf %23, %25 : vector<8x128xf32>
    %c0_19 = arith.constant 0 : index
    %c0_20 = arith.constant 0 : index
    %27 = vector.load %arg9[%c0_19, %c0_20] : memref<1x128xf32, #tpu.memory_space<vmem>>, vector<1x128xf32>
    %28 = vector.broadcast %27 : vector<1x128xf32> to vector<8x128xf32>
    %29 = arith.addf %26, %28 : vector<8x128xf32>
    %c0_21 = arith.constant 0 : index
    %c0_22 = arith.constant 0 : index
    %30 = vector.load %arg10[%c0_21, %c0_22] : memref<8x128xf32, #tpu.memory_space<vmem>>, vector<8x128xf32>
    tpu.vector_store %arg10[%c0_21, %c0_22], %29 {strides = array<i32>} : memref<8x128xf32, #tpu.memory_space<vmem>>, vector<8x128xf32>,
    return
  }
  func.func @transform_0(%arg0: i32) -> (i32, i32) {
    %c0_i32 = arith.constant 0 : i32
    %c0_i32_0 = arith.constant 0 : i32
    return %arg0, %c0_i32 : i32, i32
  }
  func.func @transform_1(%arg0: i32) -> (i32, i32) {
    %c0_i32 = arith.constant 0 : i32
    %c0_i32_0 = arith.constant 0 : i32
    %c0_i32_1 = arith.constant 0 : i32
    return %c0_i32, %c0_i32_0 : i32, i32
  }
  func.func @transform_2(%arg0: i32) -> (i32, i32) {
    %c0_i32 = arith.constant 0 : i32
    %c0_i32_0 = arith.constant 0 : i32
    %c0_i32_1 = arith.constant 0 : i32
    return %c0_i32, %c0_i32_0 : i32, i32
  }
  func.func @transform_3(%arg0: i32) -> (i32, i32) {
    %c0_i32 = arith.constant 0 : i32
    %c0_i32_0 = arith.constant 0 : i32
    %c0_i32_1 = arith.constant 0 : i32
    return %c0_i32, %c0_i32_0 : i32, i32
  }
  func.func @transform_4(%arg0: i32) -> (i32, i32) {
    %c0_i32 = arith.constant 0 : i32
    %c0_i32_0 = arith.constant 0 : i32
    %c0_i32_1 = arith.constant 0 : i32
    return %c0_i32, %c0_i32_0 : i32, i32
  }
  func.func @transform_5(%arg0: i32) -> (i32, i32) {
    %c0_i32 = arith.constant 0 : i32
    %c0_i32_0 = arith.constant 0 : i32
    %c0_i32_1 = arith.constant 0 : i32
    return %c0_i32, %c0_i32_0 : i32, i32
  }
  func.func @transform_6(%arg0: i32) -> (i32, i32) {
    %c0_i32 = arith.constant 0 : i32
    %c0_i32_0 = arith.constant 0 : i32
    %c0_i32_1 = arith.constant 0 : i32
    return %c0_i32, %c0_i32_0 : i32, i32
  }
  func.func @transform_7(%arg0: i32) -> (i32, i32) {
    %c0_i32 = arith.constant 0 : i32
    %c0_i32_0 = arith.constant 0 : i32
    %c0_i32_1 = arith.constant 0 : i32
    return %c0_i32, %c0_i32_0 : i32, i32
  }
  func.func @transform_8(%arg0: i32) -> (i32, i32) {
    %c0_i32 = arith.constant 0 : i32
    %c0_i32_0 = arith.constant 0 : i32
    %c0_i32_1 = arith.constant 0 : i32
    return %c0_i32, %c0_i32_0 : i32, i32
  }
  func.func @transform_9(%arg0: i32) -> (i32, i32) {
    %c0_i32 = arith.constant 0 : i32
    %c0_i32_0 = arith.constant 0 : i32
    return %arg0, %c0_i32 : i32, i32
  }
}

</mosaic_0001>

<llo_original>
// kernel: tpu_custom_call.1
$region0: #{tpu_custom_call.1}
  #allocation0 [shape = 'u32[]', space=smem, size = 0x4, offset = 0x4, fixed_abs, tag = 'smem constant byte address 0x4 - core index']
  #allocation1 [shape = 'u32[72,128]{1,0:T(1,128)}', space=vmem, size = 0x9000, scoped, tag = 'internal scratch']
  %s0 = inlined_call_operand.hbm [shape: f32[8,80], index: 0, kind: input, shape index: {}]
  %s1 = inlined_call_operand.hbm [shape: bf16[80,256], index: 1, kind: input, shape index: {}]
  %s2 = inlined_call_operand.hbm [shape: f32[1,256], index: 2, kind: input, shape index: {}]
  %s3 = inlined_call_operand.hbm [shape: bf16[256,256], index: 3, kind: input, shape index: {}]
  %s4 = inlined_call_operand.vmem [shape: f32[1,256], index: 4, kind: input, shape index: {}]
  %s5 = inlined_call_operand.hbm [shape: bf16[256,128], index: 5, kind: input, shape index: {}]
  %s6 = inlined_call_operand.vmem [shape: f32[1,128], index: 6, kind: input, shape index: {}]
  %s7 = inlined_call_operand.vmem [shape: f32[1,128], index: 7, kind: input, shape index: {}]
  %s8 = inlined_call_operand.vmem [shape: f32[1,128], index: 8, kind: input, shape index: {}]
  %s9 = inlined_call_operand.hbm [shape: f32[8,128], index: 9, kind: output, shape index: {}]
  %s10 = sld [smem:[#allocation0]]
  $region66: #{tpu_custom_call.1} parent=0
    _
  %s12 = ssub.s32 1, %s10
  %s13 = scalar_select 0, %s12, %s10
  $region1: #{tpu_custom_call.1} parent=0
    #allocation2 [shape = 'u8[4096]{0}', space=vmem, size = 0x1000, scoped, tag = 'input window, operand 0, single buffered']
    #allocation3 [shape = 's32[1]{0}', space=sflag, size = 0x4, scoped, tag = 'scoped memory for tpu_custom_call.1']
    #allocation4 [shape = 's32[1]{0}', space=sflag, size = 0x4, scoped, tag = 'scoped memory for tpu_custom_call.1']
    #allocation5 [shape = 'u8[40960]{0}', space=vmem, size = 0xa000, scoped, tag = 'input window, operand 1, single buffered']
    #allocation6 [shape = 's32[1]{0}', space=sflag, size = 0x4, scoped, tag = 'scoped memory for tpu_custom_call.1']
    #allocation7 [shape = 'u8[1024]{0}', space=vmem, size = 0x400, scoped, tag = 'input window, operand 2, single buffered']
    #allocation8 [shape = 'u8[131072]{0}', space=vmem, size = 0x20000, scoped, tag = 'input window, operand 3, single buffered']
    #allocation9 [shape = 's32[1]{0}', space=sflag, size = 0x4, scoped, tag = 'scoped memory for tpu_custom_call.1']
    #allocation10 [shape = 'u8[65536]{0}', space=vmem, size = 0x10000, scoped, tag = 'input window, operand 5, single buffered']
    #allocation11 [shape = 'u8[4096]{0}', space=vmem, size = 0x1000, scoped, tag = 'output window, operand 0, single buffered']
    %14 = vsyncpa [#allocation3], 0
    %15 = vsyncpa [#allocation6], 0
    %16 = vsyncpa [#allocation9], 0
    %17 = vsyncpa [#allocation4], 0
    // Predicated region
    $region2: #{tpu_custom_call.1} parent=1 // pred_check
      _
    $region3: #{tpu_custom_call.1} parent=1 // pred_check_branch
      %19 = sbr.rel (0) target = $region5
    $region4: #{tpu_custom_call.1} parent=1 // pred_region
      %21 = vsyncadd [#allocation3], 0
      %s23 = sshll.u32 %s0, 4
      %s24 = int_to_ptr.hbm [resolvable:$true] %s23
      %s25 = sshll.u32 [#allocation2], 4
      %s26 = int_to_ptr.vmem [resolvable:$true] %s25
      %28 = dma.hbm_to_vmem [thread:$0]  %s24, 128, %s26, [#allocation3]
    $region5: #{tpu_custom_call.1} parent=1 // pred_fallthru
      _
    // Predicated region
    $region6: #{tpu_custom_call.1} parent=1 // pred_check
      _
    $region7: #{tpu_custom_call.1} parent=1 // pred_check_branch
      %30 = sbr.rel (0) target = $region9
    $region8: #{tpu_custom_call.1} parent=1 // pred_region
      %32 = vsyncadd [#allocation6], 0
      %s33 = sshll.u32 %s1, 4
      %s34 = int_to_ptr.hbm [resolvable:$true] %s33
      %s35 = sshll.u32 [#allocation5], 4
      %s36 = int_to_ptr.vmem [resolvable:$true] %s35
      %41 = dma.hbm_to_vmem [thread:$0]  %s34, 1280, %s36, [#allocation6], 128, 128, 8
    $region9: #{tpu_custom_call.1} parent=1 // pred_fallthru
      _
    // Predicated region
    $region10: #{tpu_custom_call.1} parent=1 // pred_check
      _
    $region11: #{tpu_custom_call.1} parent=1 // pred_check_branch
      %43 = sbr.rel (0) target = $region13
    $region12: #{tpu_custom_call.1} parent=1 // pred_region
      %45 = vsyncadd [#allocation6], 0
      %s47 = sshll.u32 %s2, 4
      %s48 = int_to_ptr.hbm [resolvable:$true] %s47
      %s49 = sshll.u32 [#allocation7], 4
      %s50 = int_to_ptr.vmem [resolvable:$true] %s49
      %52 = dma.hbm_to_vmem [thread:$0]  %s48, 32, %s50, [#allocation6]
    $region13: #{tpu_custom_call.1} parent=1 // pred_fallthru
      _
    // Predicated region
    $region14: #{tpu_custom_call.1} parent=1 // pred_check
      _
    $region15: #{tpu_custom_call.1} parent=1 // pred_check_branch
      %54 = sbr.rel (0) target = $region17
    $region16: #{tpu_custom_call.1} parent=1 // pred_region
      %56 = vsyncadd [#allocation9], 0
      %s57 = sshll.u32 %s3, 4
      %s58 = int_to_ptr.hbm [resolvable:$true] %s57
      %s59 = sshll.u32 [#allocation8], 4
      %s60 = int_to_ptr.vmem [resolvable:$true] %s59
      %65 = dma.hbm_to_vmem [thread:$0]  %s58, 4096, %s60, [#allocation9], 128, 128, 8
    $region17: #{tpu_custom_call.1} parent=1 // pred_fallthru
      _
    // Predicated region
    $region18: #{tpu_custom_call.1} parent=1 // pred_check
      _
    $region19: #{tpu_custom_call.1} parent=1 // pred_check_branch
      %67 = sbr.rel (0) target = $region21
    $region20: #{tpu_custom_call.1} parent=1 // pred_region
      _
    $region21: #{tpu_custom_call.1} parent=1 // pred_fallthru
      _
    // Predicated region
    $region22: #{tpu_custom_call.1} parent=1 // pred_check
      _
    $region23: #{tpu_custom_call.1} parent=1 // pred_check_branch
      %69 = sbr.rel (0) target = $region25
    $region24: #{tpu_custom_call.1} parent=1 // pred_region
      %71 = vsyncadd [#allocation9], 0
      %s72 = sshll.u32 %s5, 4
      %s73 = int_to_ptr.hbm [resolvable:$true] %s72
      %s74 = sshll.u32 [#allocation10], 4
      %s75 = int_to_ptr.vmem [resolvable:$true] %s74
      %80 = dma.hbm_to_vmem [thread:$0]  %s73, 2048, %s75, [#allocation9], 64, 64, 4
    $region25: #{tpu_custom_call.1} parent=1 // pred_fallthru
      _
    // Predicated region
    $region26: #{tpu_custom_call.1} parent=1 // pred_check
      _
    $region27: #{tpu_custom_call.1} parent=1 // pred_check_branch
      %82 = sbr.rel (0) target = $region29
    $region28: #{tpu_custom_call.1} parent=1 // pred_region
      _
    $region29: #{tpu_custom_call.1} parent=1 // pred_fallthru
      _
    // Predicated region
    $region30: #{tpu_custom_call.1} parent=1 // pred_check
      _
    $region31: #{tpu_custom_call.1} parent=1 // pred_check_branch
      %84 = sbr.rel (0) target = $region33
    $region32: #{tpu_custom_call.1} parent=1 // pred_region
      _
    $region33: #{tpu_custom_call.1} parent=1 // pred_fallthru
      _
    // Predicated region
    $region34: #{tpu_custom_call.1} parent=1 // pred_check
      _
    $region35: #{tpu_custom_call.1} parent=1 // pred_check_branch
      %86 = sbr.rel (0) target = $region37
    $region36: #{tpu_custom_call.1} parent=1 // pred_region
      _
    $region37: #{tpu_custom_call.1} parent=1 // pred_fallthru
      _
    // Predicated region
    $region38: #{tpu_custom_call.1} parent=1 // pred_check
      _
    $region39: #{tpu_custom_call.1} parent=1 // pred_check_branch
      %88 = sbr.rel (0) target = $region41
    $region40: #{tpu_custom_call.1} parent=1 // pred_region
      %90 = dma.done [#allocation3], 128
    $region41: #{tpu_custom_call.1} parent=1 // pred_fallthru
      _
    // Predicated region
    $region42: #{tpu_custom_call.1} parent=1 // pred_check
      _
    $region43: #{tpu_custom_call.1} parent=1 // pred_check_branch
      %92 = sbr.rel (0) target = $region45
    $region44: #{tpu_custom_call.1} parent=1 // pred_region
      %94 = dma.done [#allocation6], 1280
    $region45: #{tpu_custom_call.1} parent=1 // pred_fallthru
      _
    // Predicated region
    $region46: #{tpu_custom_call.1} parent=1 // pred_check
      _
    $region47: #{tpu_custom_call.1} parent=1 // pred_check_branch
      %96 = sbr.rel (0) target = $region49
    $region48: #{tpu_custom_call.1} parent=1 // pred_region
      %98 = dma.done [#allocation6], 32
    $region49: #{tpu_custom_call.1} parent=1 // pred_fallthru
      _
    // Predicated region
    $region50: #{tpu_custom_call.1} parent=1 // pred_check
      _
    $region51: #{tpu_custom_call.1} parent=1 // pred_check_branch
      %100 = sbr.rel (0) target = $region53
    $region52: #{tpu_custom_call.1} parent=1 // pred_region
      %102 = dma.done [#allocation9], 4096
    $region53: #{tpu_custom_call.1} parent=1 // pred_fallthru
      _
    // Predicated region
    $region54: #{tpu_custom_call.1} parent=1 // pred_check
      _
    $region55: #{tpu_custom_call.1} parent=1 // pred_check_branch
      %104 = sbr.rel (0) target = $region57
    $region56: #{tpu_custom_call.1} parent=1 // pred_region
      %106 = dma.done [#allocation9], 2048
    $region57: #{tpu_custom_call.1} parent=1 // pred_fallthru
      _
    %v108 = vld [vmem:[#allocation2] sm:$0xff]
    %v109 = vpack.c.bf16 %v108, %v108
    %v110 = vld [vmem:[#allocation5] sm:$0xff]
    %v111 = vld [vmem:[#allocation5 + $0x8] sm:$0xff]
    %v112 = vld [vmem:[#allocation5 + $0x10] sm:$0xff]
    %v113 = vld [vmem:[#allocation5 + $0x18] sm:$0xff]
    %v114 = vld [vmem:[#allocation5 + $0x20] sm:$0xff]
    %v115 = vld [vmem:[#allocation5 + $0x28] sm:$0xff]
    %v116 = vld [vmem:[#allocation5 + $0x30] sm:$0xff]
    %v117 = vld [vmem:[#allocation5 + $0x38] sm:$0xff]
    %v118 = vld [vmem:[#allocation5 + $0x40] sm:$0xff]
    %v119 = vld [vmem:[#allocation5 + $0x48] sm:$0xff]
    %v120 = vld [vmem:[#allocation7] sm:$0x3]
    %v122 = vperm.slane %v120, 0
    %v123 = vperm.slane %v120, 1
    %v136 = vunpack.c.l.b16 %v110
    %v137 = vunpack.c.h.b16 %v110
    %v138 = vunpack.c.l.b16 %v111
    %v139 = vunpack.c.h.b16 %v111
    %v140 = vunpack.c.l.b16 %v112
    %v141 = vunpack.c.h.b16 %v112
    %v142 = vunpack.c.l.b16 %v113
    %v143 = vunpack.c.h.b16 %v113
    %v144 = vunpack.c.l.b16 %v114
    %v145 = vunpack.c.h.b16 %v114
    %v146 = vunpack.c.l.b16 %v115
    %v147 = vunpack.c.h.b16 %v115
    %v148 = vunpack.c.l.b16 %v116
    %v149 = vunpack.c.h.b16 %v116
    %v150 = vunpack.c.l.b16 %v117
    %v151 = vunpack.c.h.b16 %v117
    %v152 = vunpack.c.l.b16 %v118
    %v153 = vunpack.c.h.b16 %v118
    %v154 = vunpack.c.l.b16 %v119
    %v155 = vunpack.c.h.b16 %v119
    %v156 = vpack.c.b16 %v138, %v136
    %v157 = vpack.c.b16 %v139, %v137
    %v158 = vpack.c.b16 %v142, %v140
    %v159 = vpack.c.b16 %v143, %v141
    %v160 = vpack.c.b16 %v146, %v144
    %v161 = vpack.c.b16 %v147, %v145
    %v162 = vpack.c.b16 %v150, %v148
    %v163 = vpack.c.b16 %v151, %v149
    %v164 = vpack.c.b16 %v154, %v152
    %v165 = vpack.c.b16 %v155, %v153
    %vm176 = vcmask 654336
    %v178 = vsel %vm176, %v109, 0
    %180 = vmatpush.bf16.msra.mxu0 0
    %181 = vmatpush.bf16.msra.mxu0 0
    %182 = vmatpush.bf16.msra.mxu0 0
    %183 = vmatpush.bf16.msra.mxu0 %v164
    %184 = vmatpush.bf16.msra.mxu0 %v162
    %185 = vmatpush.bf16.msra.mxu0 %v160
    %186 = vmatpush.bf16.msra.mxu0 %v158
    %187 = vmatpush.bf16.msra.mxu0 %v156
    %188 = vmatmul.bf16.gmra.mxu0 %v178
    %v189 = vpop.f32.mrf.mxu0
    %v190 = vadd.f32 %v122, %v189
    %v191 = vpop.f32.mrf.mxu0
    %192 = vdwg.mxu0
    %193 = vmatpush.bf16.msra.mxu0 0
    %194 = vmatpush.bf16.msra.mxu0 0
    %195 = vmatpush.bf16.msra.mxu0 0
    %196 = vmatpush.bf16.msra.mxu0 %v165
    %197 = vmatpush.bf16.msra.mxu0 %v163
    %198 = vmatpush.bf16.msra.mxu0 %v161
    %199 = vmatpush.bf16.msra.mxu0 %v159
    %200 = vmatpush.bf16.msra.mxu0 %v157
    %201 = vmatmul.bf16.gmra.mxu0 %v178
    %v202 = vpop.f32.mrf.mxu0
    %v203 = vadd.f32 %v123, %v202
    %v204 = vpop.f32.mrf.mxu0
    %205 = vdwg.mxu0
    %v206 = vmax.f32 %v190, 0.0
    %v207 = vmax.f32 %v203, 0.0
    %v208 = vpack.c.bf16 %v206, %v206
    %v209 = vpack.c.bf16 %v207, %v207
    %v210 = vld [vmem:[#allocation8] sm:$0xff]
    %v211 = vld [vmem:[#allocation8 + $0x8] sm:$0xff]
    %v212 = vld [vmem:[#allocation8 + $0x10] sm:$0xff]
    %v213 = vld [vmem:[#allocation8 + $0x18] sm:$0xff]
    %v214 = vld [vmem:[#allocation8 + $0x20] sm:$0xff]
    %v215 = vld [vmem:[#allocation8 + $0x28] sm:$0xff]
    %v216 = vld [vmem:[#allocation8 + $0x30] sm:$0xff]
    %v217 = vld [vmem:[#allocation8 + $0x38] sm:$0xff]
    %v218 = vld [vmem:[#allocation8 + $0x40] sm:$0xff]
    %v219 = vld [vmem:[#allocation8 + $0x48] sm:$0xff]
    %v220 = vld [vmem:[#allocation8 + $0x50] sm:$0xff]
    %v221 = vld [vmem:[#allocation8 + $0x58] sm:$0xff]
    %v222 = vld [vmem:[#allocation8 + $0x60] sm:$0xff]
    %v223 = vld [vmem:[#allocation8 + $0x68] sm:$0xff]
    %v224 = vld [vmem:[#allocation8 + $0x70] sm:$0xff]
    %v225 = vld [vmem:[#allocation8 + $0x78] sm:$0xff]
    %v226 = vld [vmem:[#allocation8 + $0x80] sm:$0xff]
    %v227 = vld [vmem:[#allocation8 + $0x88] sm:$0xff]
    %v228 = vld [vmem:[#allocation8 + $0x90] sm:$0xff]
    %v229 = vld [vmem:[#allocation8 + $0x98] sm:$0xff]
    %v230 = vld [vmem:[#allocation8 + $0xa0] sm:$0xff]
    %v231 = vld [vmem:[#allocation8 + $0xa8] sm:$0xff]
    %v232 = vld [vmem:[#allocation8 + $0xb0] sm:$0xff]
    %v233 = vld [vmem:[#allocation8 + $0xb8] sm:$0xff]
    %v234 = vld [vmem:[#allocation8 + $0xc0] sm:$0xff]
    %v235 = vld [vmem:[#allocation8 + $0xc8] sm:$0xff]
    %v236 = vld [vmem:[#allocation8 + $0xd0] sm:$0xff]
    %v237 = vld [vmem:[#allocation8 + $0xd8] sm:$0xff]
    %v238 = vld [vmem:[#allocation8 + $0xe0] sm:$0xff]
    %v239 = vld [vmem:[#allocation8 + $0xe8] sm:$0xff]
    %v240 = vld [vmem:[#allocation8 + $0xf0] sm:$0xff]
    %v241 = vld [vmem:[#allocation8 + $0xf8] sm:$0xff]
    %v242 = vld [vmem:[%s4] sm:$0x3]
    %v244 = vperm.slane %v242, 0
    %v245 = vperm.slane %v242, 1
    %v280 = vunpack.c.l.b16 %v210
    %v281 = vunpack.c.h.b16 %v210
    %v282 = vunpack.c.l.b16 %v211
    %v283 = vunpack.c.h.b16 %v211
    %v284 = vunpack.c.l.b16 %v212
    %v285 = vunpack.c.h.b16 %v212
    %v286 = vunpack.c.l.b16 %v213
    %v287 = vunpack.c.h.b16 %v213
    %v288 = vunpack.c.l.b16 %v214
    %v289 = vunpack.c.h.b16 %v214
    %v290 = vunpack.c.l.b16 %v215
    %v291 = vunpack.c.h.b16 %v215
    %v292 = vunpack.c.l.b16 %v216
    %v293 = vunpack.c.h.b16 %v216
    %v294 = vunpack.c.l.b16 %v217
    %v295 = vunpack.c.h.b16 %v217
    %v296 = vunpack.c.l.b16 %v218
    %v297 = vunpack.c.h.b16 %v218
    %v298 = vunpack.c.l.b16 %v219
    %v299 = vunpack.c.h.b16 %v219
    %v300 = vunpack.c.l.b16 %v220
    %v301 = vunpack.c.h.b16 %v220
    %v302 = vunpack.c.l.b16 %v221
    %v303 = vunpack.c.h.b16 %v221
    %v304 = vunpack.c.l.b16 %v222
    %v305 = vunpack.c.h.b16 %v222
    %v306 = vunpack.c.l.b16 %v223
    %v307 = vunpack.c.h.b16 %v223
    %v308 = vunpack.c.l.b16 %v224
    %v309 = vunpack.c.h.b16 %v224
    %v310 = vunpack.c.l.b16 %v225
    %v311 = vunpack.c.h.b16 %v225
    %v312 = vunpack.c.l.b16 %v226
    %v313 = vunpack.c.h.b16 %v226
    %v314 = vunpack.c.l.b16 %v227
    %v315 = vunpack.c.h.b16 %v227
    %v316 = vunpack.c.l.b16 %v228
    %v317 = vunpack.c.h.b16 %v228
    %v318 = vunpack.c.l.b16 %v229
    %v319 = vunpack.c.h.b16 %v229
    %v320 = vunpack.c.l.b16 %v230
    %v321 = vunpack.c.h.b16 %v230
    %v322 = vunpack.c.l.b16 %v231
    %v323 = vunpack.c.h.b16 %v231
    %v324 = vunpack.c.l.b16 %v232
    %v325 = vunpack.c.h.b16 %v232
    %v326 = vunpack.c.l.b16 %v233
    %v327 = vunpack.c.h.b16 %v233
    %v328 = vunpack.c.l.b16 %v234
    %v329 = vunpack.c.h.b16 %v234
    %v330 = vunpack.c.l.b16 %v235
    %v331 = vunpack.c.h.b16 %v235
    %v332 = vunpack.c.l.b16 %v236
    %v333 = vunpack.c.h.b16 %v236
    %v334 = vunpack.c.l.b16 %v237
    %v335 = vunpack.c.h.b16 %v237
    %v336 = vunpack.c.l.b16 %v238
    %v337 = vunpack.c.h.b16 %v238
    %v338 = vunpack.c.l.b16 %v239
    %v339 = vunpack.c.h.b16 %v239
    %v340 = vunpack.c.l.b16 %v240
    %v341 = vunpack.c.h.b16 %v240
    %v342 = vunpack.c.l.b16 %v241
    %v343 = vunpack.c.h.b16 %v241
    %v344 = vpack.c.b16 %v282, %v280
    %v345 = vpack.c.b16 %v283, %v281
    %v346 = vpack.c.b16 %v286, %v284
    %v347 = vpack.c.b16 %v287, %v285
    %v348 = vpack.c.b16 %v290, %v288
    %v349 = vpack.c.b16 %v291, %v289
    %v350 = vpack.c.b16 %v294, %v292
    %v351 = vpack.c.b16 %v295, %v293
    %v352 = vpack.c.b16 %v298, %v296
    %v353 = vpack.c.b16 %v299, %v297
    %v354 = vpack.c.b16 %v302, %v300
    %v355 = vpack.c.b16 %v303, %v301
    %v356 = vpack.c.b16 %v306, %v304
    %v357 = vpack.c.b16 %v307, %v305
    %v358 = vpack.c.b16 %v310, %v308
    %v359 = vpack.c.b16 %v311, %v309
    %v360 = vpack.c.b16 %v314, %v312
    %v361 = vpack.c.b16 %v315, %v313
    %v362 = vpack.c.b16 %v318, %v316
    %v363 = vpack.c.b16 %v319, %v317
    %v364 = vpack.c.b16 %v322, %v320
    %v365 = vpack.c.b16 %v323, %v321
    %v366 = vpack.c.b16 %v326, %v324
    %v367 = vpack.c.b16 %v327, %v325
    %v368 = vpack.c.b16 %v330, %v328
    %v369 = vpack.c.b16 %v331, %v329
    %v370 = vpack.c.b16 %v334, %v332
    %v371 = vpack.c.b16 %v335, %v333
    %v372 = vpack.c.b16 %v338, %v336
    %v373 = vpack.c.b16 %v339, %v337
    %v374 = vpack.c.b16 %v342, %v340
    %v375 = vpack.c.b16 %v343, %v341
    %408 = vmatpush.bf16.msra.mxu0 %v358
    %409 = vmatpush.bf16.msra.mxu0 %v356
    %410 = vmatpush.bf16.msra.mxu0 %v354
    %411 = vmatpush.bf16.msra.mxu0 %v352
    %412 = vmatpush.bf16.msra.mxu0 %v350
    %413 = vmatpush.bf16.msra.mxu0 %v348
    %414 = vmatpush.bf16.msra.mxu0 %v346
    %415 = vmatpush.bf16.msra.mxu0 %v344
    %416 = vmatmul.bf16.gmra.mxu0 %v208
    %v417 = vpop.f32.mrf.mxu0
    %v418 = vadd.f32 %v244, %v417
    %v419 = vpop.f32.mrf.mxu0
    %420 = vdwg.mxu0
    %421 = vmatpush.bf16.msra.mxu0 %v374
    %422 = vmatpush.bf16.msra.mxu0 %v372
    %423 = vmatpush.bf16.msra.mxu0 %v370
    %424 = vmatpush.bf16.msra.mxu0 %v368
    %425 = vmatpush.bf16.msra.mxu0 %v366
    %426 = vmatpush.bf16.msra.mxu0 %v364
    %427 = vmatpush.bf16.msra.mxu0 %v362
    %428 = vmatpush.bf16.msra.mxu0 %v360
    %429 = vmatmul.bf16.gmra.mxu0 %v209
    %v430 = vpop.f32.mrf.mxu0
    %v431 = vadd.f32 %v418, %v430
    %v432 = vpop.f32.mrf.mxu0
    %433 = vdwg.mxu0
    %434 = vmatpush.bf16.msra.mxu0 %v359
    %435 = vmatpush.bf16.msra.mxu0 %v357
    %436 = vmatpush.bf16.msra.mxu0 %v355
    %437 = vmatpush.bf16.msra.mxu0 %v353
    %438 = vmatpush.bf16.msra.mxu0 %v351
    %439 = vmatpush.bf16.msra.mxu0 %v349
    %440 = vmatpush.bf16.msra.mxu0 %v347
    %441 = vmatpush.bf16.msra.mxu0 %v345
    %442 = vmatmul.bf16.gmra.mxu0 %v208
    %v443 = vpop.f32.mrf.mxu0
    %v444 = vadd.f32 %v245, %v443
    %v445 = vpop.f32.mrf.mxu0
    %446 = vdwg.mxu0
    %447 = vmatpush.bf16.msra.mxu0 %v375
    %448 = vmatpush.bf16.msra.mxu0 %v373
    %449 = vmatpush.bf16.msra.mxu0 %v371
    %450 = vmatpush.bf16.msra.mxu0 %v369
    %451 = vmatpush.bf16.msra.mxu0 %v367
    %452 = vmatpush.bf16.msra.mxu0 %v365
    %453 = vmatpush.bf16.msra.mxu0 %v363
    %454 = vmatpush.bf16.msra.mxu0 %v361
    %455 = vmatmul.bf16.gmra.mxu0 %v209
    %v456 = vpop.f32.mrf.mxu0
    %v457 = vadd.f32 %v444, %v456
    %v458 = vpop.f32.mrf.mxu0
    %459 = vdwg.mxu0
    %v460 = vmax.f32 %v431, 0.0
    %v461 = vmax.f32 %v457, 0.0
    %v462 = vpack.c.bf16 %v460, %v460
    %v463 = vpack.c.bf16 %v461, %v461
    %v464 = vld [vmem:[#allocation10] sm:$0xf]
    %v465 = vld [vmem:[#allocation10 + $0x4] sm:$0xf]
    %v466 = vld [vmem:[#allocation10 + $0x8] sm:$0xf]
    %v467 = vld [vmem:[#allocation10 + $0xc] sm:$0xf]
    %v468 = vld [vmem:[#allocation10 + $0x10] sm:$0xf]
    %v469 = vld [vmem:[#allocation10 + $0x14] sm:$0xf]
    %v470 = vld [vmem:[#allocation10 + $0x18] sm:$0xf]
    %v471 = vld [vmem:[#allocation10 + $0x1c] sm:$0xf]
    %v472 = vld [vmem:[#allocation10 + $0x20] sm:$0xf]
    %v473 = vld [vmem:[#allocation10 + $0x24] sm:$0xf]
    %v474 = vld [vmem:[#allocation10 + $0x28] sm:$0xf]
    %v475 = vld [vmem:[#allocation10 + $0x2c] sm:$0xf]
    %v476 = vld [vmem:[#allocation10 + $0x30] sm:$0xf]
    %v477 = vld [vmem:[#allocation10 + $0x34] sm:$0xf]
    %v478 = vld [vmem:[#allocation10 + $0x38] sm:$0xf]
    %v479 = vld [vmem:[#allocation10 + $0x3c] sm:$0xf]
    %v480 = vld [vmem:[#allocation10 + $0x40] sm:$0xf]
    %v481 = vld [vmem:[#allocation10 + $0x44] sm:$0xf]
    %v482 = vld [vmem:[#allocation10 + $0x48] sm:$0xf]
    %v483 = vld [vmem:[#allocation10 + $0x4c] sm:$0xf]
    %v484 = vld [vmem:[#allocation10 + $0x50] sm:$0xf]
    %v485 = vld [vmem:[#allocation10 + $0x54] sm:$0xf]
    %v486 = vld [vmem:[#allocation10 + $0x58] sm:$0xf]
    %v487 = vld [vmem:[#allocation10 + $0x5c] sm:$0xf]
    %v488 = vld [vmem:[#allocation10 + $0x60] sm:$0xf]
    %v489 = vld [vmem:[#allocation10 + $0x64] sm:$0xf]
    %v490 = vld [vmem:[#allocation10 + $0x68] sm:$0xf]
    %v491 = vld [vmem:[#allocation10 + $0x6c] sm:$0xf]
    %v492 = vld [vmem:[#allocation10 + $0x70] sm:$0xf]
    %v493 = vld [vmem:[#allocation10 + $0x74] sm:$0xf]
    %v494 = vld [vmem:[#allocation10 + $0x78] sm:$0xf]
    %v495 = vld [vmem:[#allocation10 + $0x7c] sm:$0xf]
    %v496 = vld [vmem:[%s6] sm:$0x1]
    %v498 = vperm.slane %v496, 0
    %v532 = vunpack.c.l.b16 %v464
    %v533 = vunpack.c.l.b16 %v465
    %v534 = vunpack.c.l.b16 %v466
    %v535 = vunpack.c.l.b16 %v467
    %v536 = vunpack.c.l.b16 %v468
    %v537 = vunpack.c.l.b16 %v469
    %v538 = vunpack.c.l.b16 %v470
    %v539 = vunpack.c.l.b16 %v471
    %v540 = vunpack.c.l.b16 %v472
    %v541 = vunpack.c.l.b16 %v473
    %v542 = vunpack.c.l.b16 %v474
    %v543 = vunpack.c.l.b16 %v475
    %v544 = vunpack.c.l.b16 %v476
    %v545 = vunpack.c.l.b16 %v477
    %v546 = vunpack.c.l.b16 %v478
    %v547 = vunpack.c.l.b16 %v479
    %v548 = vunpack.c.l.b16 %v480
    %v549 = vunpack.c.l.b16 %v481
    %v550 = vunpack.c.l.b16 %v482
    %v551 = vunpack.c.l.b16 %v483
    %v552 = vunpack.c.l.b16 %v484
    %v553 = vunpack.c.l.b16 %v485
    %v554 = vunpack.c.l.b16 %v486
    %v555 = vunpack.c.l.b16 %v487
    %v556 = vunpack.c.l.b16 %v488
    %v557 = vunpack.c.l.b16 %v489
    %v558 = vunpack.c.l.b16 %v490
    %v559 = vunpack.c.l.b16 %v491
    %v560 = vunpack.c.l.b16 %v492
    %v561 = vunpack.c.l.b16 %v493
    %v562 = vunpack.c.l.b16 %v494
    %v563 = vunpack.c.l.b16 %v495
    %v564 = vpack.c.b16 %v533, %v532
    %v565 = vpack.c.b16 %v535, %v534
    %v566 = vpack.c.b16 %v537, %v536
    %v567 = vpack.c.b16 %v539, %v538
    %v568 = vpack.c.b16 %v541, %v540
    %v569 = vpack.c.b16 %v543, %v542
    %v570 = vpack.c.b16 %v545, %v544
    %v571 = vpack.c.b16 %v547, %v546
    %v572 = vpack.c.b16 %v549, %v548
    %v573 = vpack.c.b16 %v551, %v550
    %v574 = vpack.c.b16 %v553, %v552
    %v575 = vpack.c.b16 %v555, %v554
    %v576 = vpack.c.b16 %v557, %v556
    %v577 = vpack.c.b16 %v559, %v558
    %v578 = vpack.c.b16 %v561, %v560
    %v579 = vpack.c.b16 %v563, %v562
    %596 = vmatpush.bf16.msra.mxu0 %v571
    %597 = vmatpush.bf16.msra.mxu0 %v570
    %598 = vmatpush.bf16.msra.mxu0 %v569
    %599 = vmatpush.bf16.msra.mxu0 %v568
    %600 = vmatpush.bf16.msra.mxu0 %v567
    %601 = vmatpush.bf16.msra.mxu0 %v566
    %602 = vmatpush.bf16.msra.mxu0 %v565
    %603 = vmatpush.bf16.msra.mxu0 %v564
    %604 = vmatmul.bf16.gmra.mxu0 %v462
    %v605 = vpop.f32.mrf.mxu0
    %v606 = vadd.f32 %v498, %v605
    %v607 = vpop.f32.mrf.mxu0
    %608 = vdwg.mxu0
    %609 = vmatpush.bf16.msra.mxu0 %v579
    %610 = vmatpush.bf16.msra.mxu0 %v578
    %611 = vmatpush.bf16.msra.mxu0 %v577
    %612 = vmatpush.bf16.msra.mxu0 %v576
    %613 = vmatpush.bf16.msra.mxu0 %v575
    %614 = vmatpush.bf16.msra.mxu0 %v574
    %615 = vmatpush.bf16.msra.mxu0 %v573
    %616 = vmatpush.bf16.msra.mxu0 %v572
    %617 = vmatmul.bf16.gmra.mxu0 %v463
    %v618 = vpop.f32.mrf.mxu0
    %v619 = vadd.f32 %v606, %v618
    %v620 = vpop.f32.mrf.mxu0
    %621 = vdwg.mxu0
    %v622 = vtanh.pop %v619
    %v623 = vld [vmem:[%s7] sm:$0x1]
    %v625 = vperm.slane %v623, 0
    %v627 = vmul.f32 %v622, %v625
    %v628 = vld [vmem:[%s8] sm:$0x1]
    %v630 = vperm.slane %v628, 0
    %v632 = vadd.f32 %v627, %v630
    %633 = vst [vmem:[#allocation11] sm:$0xff] %v632
    // Predicated region
    $region58: #{tpu_custom_call.1} parent=1 // pred_check
      _
    $region59: #{tpu_custom_call.1} parent=1 // pred_check_branch
      %635 = sbr.rel (0) target = $region61
    $region60: #{tpu_custom_call.1} parent=1 // pred_region
      %637 = vsyncadd [#allocation4], 0
      %s639 = sshll.u32 [#allocation11], 4
      %s640 = int_to_ptr.vmem [resolvable:$true] %s639
      %s641 = sshll.u32 %s9, 4
      %s642 = int_to_ptr.hbm [resolvable:$true] %s641
      %644 = dma.vmem_to_hbm [thread:$0]  %s640, 128, %s642, [#allocation4]
    $region61: #{tpu_custom_call.1} parent=1 // pred_fallthru
      _
    // Predicated region
    $region62: #{tpu_custom_call.1} parent=1 // pred_check
      _
    $region63: #{tpu_custom_call.1} parent=1 // pred_check_branch
      %646 = sbr.rel (0) target = $region65
    $region64: #{tpu_custom_call.1} parent=1 // pred_region
      %648 = dma.done [#allocation4], 128
    $region65: #{tpu_custom_call.1} parent=1 // pred_fallthru
      _
    %649 = vsyncpa [#allocation3], 1
    %650 = vsyncpa [#allocation6], 1
    %651 = vsyncpa [#allocation9], 1
    %652 = vsyncpa [#allocation4], 1

</llo_original>
